<compile_context>
chip_gen: v6e
topology: v6e:2x2x1
jax: 0.10.0
libtpu: 0.0.40
codegen_flags: <defaults>
</compile_context>

<pallas_src>
import functools

import jax
import jax.numpy as jnp
from jax import lax
from jax.experimental import pallas as pl
from jax.experimental.pallas import tpu as pltpu


# ---------------------------------------------------------------------------
# PixelCNN causal-mask helpers (static Python; ksize known at trace time)
# ---------------------------------------------------------------------------
def live_taps(mask_type, ksize):
    """(dh, dw) taps NOT zeroed by the PixelCNN causal mask."""
    yc = xc = ksize // 2
    taps = []
    for r in range(ksize):
        for c in range(ksize):
            if r < yc or (r == yc and (c < xc or (mask_type == 'B' and c == xc))):
                taps.append((r, c))
    return tuple(taps)


def causal_mask(mask_type, ksize):
    yc = xc = ksize // 2
    rows = jnp.arange(ksize)[:, None]
    cols = jnp.arange(ksize)[None, :]
    if mask_type == 'A':
        m = (rows < yc) | ((rows == yc) & (cols < xc))
    else:  # 'B'
        m = (rows < yc) | ((rows == yc) & (cols <= xc))
    return m.astype(jnp.float32)


# ---------------------------------------------------------------------------
# Parameter setup (deterministic, causal masks baked into the weights)
# ---------------------------------------------------------------------------
def init_params(key, feature_input_dim=16, out_ch=1, ksize=3, depth=3, mid_dim=32):
    assert depth >= 2, "depth == 1 variant not implemented"  # TODO(synk)
    in_ch = feature_input_dim + out_ch
    specs = [('A', in_ch, 2 * mid_dim, True)]
    for _ in range(depth - 2):
        specs.append(('B', mid_dim, 2 * mid_dim, True))
    specs.append(('B', mid_dim, out_ch, False))

    params = []
    for (mt, cin, cout, gated) in specs:
        key, kw, kb = jax.random.split(key, 3)
        fan_in = cin * ksize * ksize
        w = jax.random.normal(kw, (ksize, ksize, cin, cout), jnp.float32) / jnp.sqrt(fan_in)
        w = w * causal_mask(mt, ksize)[:, :, None, None]   # bake PixelCNN mask in
        b = 0.01 * jax.random.normal(kb, (1, cout), jnp.float32)
        params.append({'w': w, 'b': b, 'mask': mt, 'gated': gated})
    return params


def prepare_kernel_params(params, ksize):
    """Per-live-tap weight stacks for the transposed (C, M) layout.

    Gated layers: (T, 2*mid, cin) bf16 LHS stacks (merged tanh/sigmoid halves,
    one 64-wide matmul per tap) + (2*mid, 1) f32 bias column.
    Final layer : (T, cin, 1) f32 (VPU path) + (1, 1) f32 bias.
    """
    layers = []
    for p in params:
        taps = live_taps(p['mask'], ksize)
        w, b = p['w'], p['b']
        cout = w.shape[-1]
        if p['gated']:
            w_stack = jnp.stack([w[dh, dw].T for (dh, dw) in taps],
                                axis=0).astype(jnp.bfloat16)        # (T, 2*mid, cin)
            b_col = b.reshape(cout, 1).astype(jnp.float32)
            layers.append(dict(kind='gated', taps=taps, mid=cout // 2,
                               arrays=(w_stack, b_col)))
        else:
            assert cout == 1, "only out_ch == 1 supported"           # TODO(synk)
            w_stack = jnp.stack([w[dh, dw] for (dh, dw) in taps],
                                axis=0).astype(jnp.float32)          # (T, cin, 1)
            b_col = b.reshape(1, 1).astype(jnp.float32)
            layers.append(dict(kind='out', taps=taps, mid=1,
                               arrays=(w_stack, b_col)))
    return layers


# ---------------------------------------------------------------------------
# One-time probe pinning pltpu.roll's rotation sign to the jnp.roll convention
# (keeps the kernel robust across Mosaic rotate-direction conventions).
# ---------------------------------------------------------------------------
@functools.cache
def _roll_sign():
    x = jnp.arange(8 * 128, dtype=jnp.float32).reshape(8, 128)

    def k(x_ref, o_ref):
        o_ref[...] = pltpu.roll(x_ref[...], 1, axis=1)

    y = pl.pallas_call(k, out_shape=jax.ShapeDtypeStruct((8, 128), jnp.float32))(x)
    return 1 if bool(jnp.all(y == jnp.roll(x, 1, axis=1))) else -1


# ---------------------------------------------------------------------------
# Fused Pallas kernel: all layers + gating in one invocation.
# Activations live as (channels, B_TILE*H*W) values: channels on sublanes,
# flattened pixels on the 128-lane axis.  Causal taps = lane rotations + masks.
# ---------------------------------------------------------------------------
def build_fused_kernel(layer_meta, H, W, ksize, b_tile, roll_sign):
    BM = b_tile * H * W
    yc = xc = ksize // 2

    def kernel(*refs):
        x_ref = refs[0]
        pos = 1
        layer_refs = []
        for _ in layer_meta:
            layer_refs.append(refs[pos:pos + 2])
            pos += 2
        o_ref = refs[pos]

        # Per-pixel row/col indices (shared by every layer / tap).
        pix = lax.broadcasted_iota(jnp.int32, (1, BM), 1)
        col = pix % W
        row = (pix // W) % H

        mask_cache = {}

        def tap_mask(dy, dx):
            """Validity mask for tap (dy, dx): zero-padding + wraparound guard."""
            key = (dy, dx)
            if key in mask_cache:
                return mask_cache[key]
            m = None
            if dy < 0:
                m = row >= -dy
            if dx < 0:
                c = col >= -dx
                m = c if m is None else jnp.logical_and(m, c)
            if dx > 0:
                c = col <= (W - 1 - dx)
                m = c if m is None else jnp.logical_and(m, c)
            mask_cache[key] = m
            return m

        def shifted(src, dy, dx):
            """patch[:, m] = src[:, m + dy*W + dx]; wrapped lanes are masked out."""
            k = -(dy * W + dx)
            if k == 0:
                return src
            amount = k if roll_sign > 0 else (BM - k)
            return pltpu.roll(src, amount, axis=1)

        h = x_ref[0].astype(jnp.float32)                          # (Cin, BM)
        for meta, (w_ref, b_ref) in zip(layer_meta, layer_refs):
            taps = meta['taps']
            if meta['kind'] == 'gated':
                mid = meta['mid']
                acc = jnp.zeros((2 * mid, BM), jnp.float32)
                for t, (dh, dw) in enumerate(taps):
                    dy, dx = dh - yc, dw - xc
                    r = shifted(h, dy, dx)
                    m = tap_mask(dy, dx)
                    if m is not None:
                        r = jnp.where(m, r, 0.0)
                    # Merged 64-wide matmul per tap, bf16 operands, f32 accum.
                    acc = acc + jnp.dot(w_ref[t], r.astype(jnp.bfloat16),
                                        preferred_element_type=jnp.float32)
                bias = b_ref[...]                                 # (2*mid, 1) f32
                yt = acc[:mid, :] + bias[:mid, :]                 # sublane-aligned split
                ys = acc[mid:, :] + bias[mid:, :]
                h = jnp.tanh(yt) * jax.nn.sigmoid(ys)             # (mid, BM) f32
            else:
                # Final MaskedConv2d('B', mid, 1) + Sigmoid: Cout == 1, so keep
                # it on the VPU/XLU (weighted channel sum, one sublane reduce).
                cin = h.shape[0]
                acc = jnp.zeros((cin, BM), jnp.float32)
                for t, (dh, dw) in enumerate(taps):
                    dy, dx = dh - yc, dw - xc
                    r = shifted(h, dy, dx)
                    m = tap_mask(dy, dx)
                    if m is not None:
                        r = jnp.where(m, r, 0.0)
                    acc = acc + r * w_ref[t]                      # (cin, 1) broadcast
                logits = jnp.sum(acc, axis=0, keepdims=True) + b_ref[...]  # (1, BM)
                o_ref[0] = jax.nn.sigmoid(logits).astype(o_ref.dtype)

    return kernel


# ---------------------------------------------------------------------------
# Full forward (PyTorch-equivalent semantics, NCHW in / NCHW out)
# ---------------------------------------------------------------------------
def pixcnn_prior_v2(feature_nchw, halftone_nchw, params, ksize=3):
    x = jnp.concatenate([feature_nchw, halftone_nchw], axis=1)    # torch.cat(dim=1)
    N, C0, H, W = x.shape

    # Batch images per grid step (amortizes ~0.35us/step overhead) while keeping
    # the grid >= 2 so both v7x TensorCores get work.  B_TILE capped at 2 so the
    # merged (64, B_TILE*H*W) f32 accumulator stays ~32 vregs (no-spill regime).
    b_tile = 2 if (N % 2 == 0 and N >= 4) else 1
    G = N // b_tile
    BM = b_tile * H * W

    # NCHW -> (grid, channels, B_TILE*H*W): channels on sublanes, pixels lane-dense.
    xk = (x.reshape(G, b_tile, C0, H * W)
           .transpose(0, 2, 1, 3)
           .reshape(G, C0, BM)
           .astype(jnp.float32))

    layers = prepare_kernel_params(params, ksize)

    flat_inputs = [xk]
    in_specs = [pl.BlockSpec((1, C0, BM), lambda g: (g, 0, 0))]
    for layer in layers:
        for a in layer['arrays']:
            flat_inputs.append(a)
            in_specs.append(pl.BlockSpec(a.shape, lambda g, nd=a.ndim: (0,) * nd))

    layer_meta = [dict(kind=l['kind'], taps=l['taps'], mid=l['mid']) for l in layers]
    kernel = build_fused_kernel(layer_meta, H, W, ksize, b_tile, _roll_sign())

    out = pl.pallas_call(
        kernel,
        out_shape=jax.ShapeDtypeStruct((G, 1, BM), jnp.float32),
        grid_spec=pltpu.PrefetchScalarGridSpec(
            num_scalar_prefetch=0,
            grid=(G,),
            in_specs=in_specs,
            out_specs=pl.BlockSpec((1, 1, BM), lambda g: (g, 0, 0))),
        compiler_params=pltpu.CompilerParams(
            dimension_semantics=("parallel",)),   # shard batch tiles across TCs
    )(*flat_inputs)

    # (G, 1, B_TILE*H*W) -> (N, 1, H, W)
    return out.reshape(G * b_tile, H, W)[:, None, :, :]


# ---------------------------------------------------------------------------
# Pure-JAX reference (lax.conv, HIGHEST precision) for validation
# ---------------------------------------------------------------------------
def pixcnn_prior_v2_ref(feature_nchw, halftone_nchw, params):
    x = jnp.concatenate([feature_nchw, halftone_nchw], axis=1)
    x = jnp.transpose(x, (0, 2, 3, 1))
    for p in params:
        y = jax.lax.conv_general_dilated(
            x, p['w'], window_strides=(1, 1), padding='SAME',
            dimension_numbers=('NHWC', 'HWIO', 'NHWC'),
            precision=jax.lax.Precision.HIGHEST) + p['b'].reshape(1, 1, 1, -1)
        if p['gated']:
            c = y.shape[-1] // 2
            x = jnp.tanh(y[..., :c]) * jax.nn.sigmoid(y[..., c:])
        else:
            x = jax.nn.sigmoid(y)
    return jnp.transpose(x, (0, 3, 1, 2))


if __name__ == "__main__":
    key = jax.random.PRNGKey(0)
    k_feat, k_half, k_param = jax.random.split(key, 3)

    N, C_FEAT, C_OUT, H, W = 4, 16, 1, 16, 16
    feature = jax.random.normal(k_feat, (N, C_FEAT, H, W), jnp.float32)
    halftone = jax.random.normal(k_half, (N, C_OUT, H, W), jnp.float32)
    params = init_params(k_param, feature_input_dim=C_FEAT, out_ch=C_OUT)

    out = pixcnn_prior_v2(feature, halftone, params)
    out = jax.block_until_ready(out)

    assert out.shape == (N, C_OUT, H, W), out.shape
    ref = pixcnn_prior_v2_ref(feature, halftone, params)
    max_err = float(jnp.max(jnp.abs(out - ref)))
    # bf16 MXU operands (f32 accumulation) => looser tolerance than the f32 path.
    assert jnp.all(jnp.isfinite(out)) and max_err < 2e-2, f"max abs err {max_err}"

    print("KERNEL_OK")
</pallas_src>

<mosaic_0001>
module attributes {stable_mosaic.version = 11 : i64} {
  func.func @k(%arg0: memref<8x128xf32, #tpu.memory_space<vmem>>, %arg1: memref<8x128xf32, #tpu.memory_space<vmem>>) attributes {dimension_semantics = [], scalar_prefetch = 0 : i64, scratch_operands = 0 : i64, tpu.core_type = #tpu.core_type<tc>} {
    %c0 = arith.constant 0 : index
    %c0_0 = arith.constant 0 : index
    %0 = vector.load %arg0[%c0, %c0_0] : memref<8x128xf32, #tpu.memory_space<vmem>>, vector<8x128xf32>
    %c1_i32 = arith.constant 1 : i32
    %1 = tpu.dynamic_rotate %0 by %c1_i32 dim 1 : vector<8x128xf32>, i32 -> vector<8x128xf32>
    %c0_1 = arith.constant 0 : index
    %c0_2 = arith.constant 0 : index
    %2 = vector.load %arg1[%c0_1, %c0_2] : memref<8x128xf32, #tpu.memory_space<vmem>>, vector<8x128xf32>
    tpu.vector_store %arg1[%c0_1, %c0_2], %1 {strides = array<i32>} : memref<8x128xf32, #tpu.memory_space<vmem>>, vector<8x128xf32>,
    return
  }
}

</mosaic_0001>

<llo_original>
// kernel: tpu_custom_call.1
$region0: #{tpu_custom_call.1}
  #allocation0 [shape = 'u32[]', space=smem, size = 0x4, offset = 0x4, fixed_abs, tag = 'smem constant byte address 0x4 - core index']
  #allocation1 [shape = 'u32[144,128]{1,0:T(1,128)}', space=vmem, size = 0x12000, scoped, tag = 'internal scratch']
  %s0 = inlined_call_operand.hbm [shape: f32[8,128], index: 0, kind: input, shape index: {}]
  %s1 = inlined_call_operand.hbm [shape: f32[8,128], index: 1, kind: output, shape index: {}]
  %s2 = sld [smem:[#allocation0]]
  $region18: #{tpu_custom_call.1} parent=0
    _
  %s4 = ssub.s32 1, %s2
  %s5 = scalar_select 0, %s4, %s2
  $region1: #{tpu_custom_call.1} parent=0
    #allocation2 [shape = 'u8[4096]{0}', space=vmem, size = 0x1000, scoped, tag = 'input window, operand 0, single buffered']
    #allocation3 [shape = 's32[1]{0}', space=sflag, size = 0x4, scoped, tag = 'scoped memory for tpu_custom_call.1']
    #allocation4 [shape = 's32[1]{0}', space=sflag, size = 0x4, scoped, tag = 'scoped memory for tpu_custom_call.1']
    #allocation5 [shape = 'u8[4096]{0}', space=vmem, size = 0x1000, scoped, tag = 'output window, operand 0, single buffered']
    %6 = vsyncpa [#allocation3], 0
    %7 = vsyncpa [#allocation4], 0
    // Predicated region
    $region2: #{tpu_custom_call.1} parent=1 // pred_check
      _
    $region3: #{tpu_custom_call.1} parent=1 // pred_check_branch
      %9 = sbr.rel (0) target = $region5
    $region4: #{tpu_custom_call.1} parent=1 // pred_region
      %s11 = ssub.s32 128, 128
      %12 = vsyncadd [#allocation3], %s11
      %s14 = sshll.u32 [#allocation2], 4
      %s15 = int_to_ptr.vmem [resolvable:$true] %s14
      %17 = dma.hbm_to_vmem [thread:$0]  %s0, 128, %s15, [#allocation3]
    $region5: #{tpu_custom_call.1} parent=1 // pred_fallthru
      _
    // Predicated region
    $region6: #{tpu_custom_call.1} parent=1 // pred_check
      _
    $region7: #{tpu_custom_call.1} parent=1 // pred_check_branch
      %19 = sbr.rel (0) target = $region9
    $region8: #{tpu_custom_call.1} parent=1 // pred_region
      %20 = dma.done [#allocation3], 128
    $region9: #{tpu_custom_call.1} parent=1 // pred_fallthru
      _
    %v21 = vld [vmem:[#allocation2] sm:$0xff]
    %22 = vrot.lane.b32.xlu0 %v21, 1
    %v23 = vpop.permute.xlu0 %22
    %24 = vst [vmem:[#allocation5] sm:$0xff] %v23
    // Predicated region
    $region10: #{tpu_custom_call.1} parent=1 // pred_check
      _
    $region11: #{tpu_custom_call.1} parent=1 // pred_check_branch
      %26 = sbr.rel (0) target = $region13
    $region12: #{tpu_custom_call.1} parent=1 // pred_region
      %s28 = ssub.s32 128, 128
      %29 = vsyncadd [#allocation4], %s28
      %s31 = sshll.u32 [#allocation5], 4
      %s32 = int_to_ptr.vmem [resolvable:$true] %s31
      %34 = dma.vmem_to_hbm [thread:$0]  %s32, 128, %s1, [#allocation4]
    $region13: #{tpu_custom_call.1} parent=1 // pred_fallthru
      _
    // Predicated region
    $region14: #{tpu_custom_call.1} parent=1 // pred_check
      _
    $region15: #{tpu_custom_call.1} parent=1 // pred_check_branch
      %36 = sbr.rel (0) target = $region17
    $region16: #{tpu_custom_call.1} parent=1 // pred_region
      %37 = dma.done [#allocation4], 128
    $region17: #{tpu_custom_call.1} parent=1 // pred_fallthru
      _
    %38 = vsyncpa [#allocation3], 1
    %39 = vsyncpa [#allocation4], 1

</llo_original>
